<compile_context>
chip_gen: v7x
topology: tpu7x:2x2x1
jax: 0.10.0
libtpu: 0.0.40
codegen_flags: <defaults>
</compile_context>

<pallas_src>
import functools
import math

import jax
import jax.numpy as jnp
from jax import lax
from jax.experimental import pallas as pl
from jax.experimental.pallas import tpu as pltpu

_INV_SQRT2 = 1.0 / math.sqrt(2.0)
_MIB = 1024 * 1024


def _gelu_exact(x):
    # Matches torch.nn.functional.gelu (approximate='none'): 0.5*x*(1+erf(x/sqrt(2)))
    return 0.5 * x * (1.0 + lax.erf(x * _INV_SQRT2))


def _cdiv(a, b):
    return (a + b - 1) // b


def _round_up(x, m):
    return _cdiv(x, m) * m


def _tpu_vmem_capacity():
    """Returns (per-core VMEM bytes, query_succeeded)."""
    try:
        return int(pltpu.get_tpu_info().vmem_capacity_bytes), True
    except Exception:
        return 64 * _MIB, False  # conservative default = v7x per-TC size


def _vmem_estimate(tm, ti, D, w_itemsize, out_itemsize):
    """Bytes Mosaic needs for one pipelined step of this kernel."""
    dbuf_in = 2 * (tm * D + D * 2 * ti + ti * D) * w_itemsize   # double-buffered x / wgu / wd
    dbuf_out = 2 * tm * D * out_itemsize                        # double-buffered output tile
    acc = tm * D * 4                                            # f32 accumulator scratch
    # in-kernel intermediates: gu (tm, 2ti) f32, act (tm, ti) f32, z (tm, ti) compute dtype
    interm = tm * 2 * ti * 4 + tm * ti * 4 + tm * ti * w_itemsize
    return dbuf_in + dbuf_out + acc + interm


def _pick_inter_tile(I, D, w_itemsize, inter_tile=None):
    if inter_tile is not None:
        if I % inter_tile != 0:
            raise ValueError(f"inter_tile={inter_tile} must divide intermediate_size={I}")
        return inter_tile
    cands = [c for c in (512, 256, 128) if I % c == 0]
    if not cands:
        return I  # small / odd intermediate sizes: single tile
    cap, _ = _tpu_vmem_capacity()
    budget = int(cap * 0.65)
    for ti in cands:  # budget against the preferred large-M row tile (512)
        if _vmem_estimate(512, ti, D, w_itemsize, 4) <= budget:
            return ti
    return cands[-1]


def _pick_row_tile(M, ti, D, w_itemsize, out_itemsize, row_tile=None):
    sub_align = 16 if w_itemsize <= 2 else 8  # bf16 sublane packing is 16
    if row_tile is not None:
        return max(sub_align, _round_up(row_tile, sub_align))
    m_cap = _round_up(M, sub_align)
    cap, known = _tpu_vmem_capacity()
    budget = int(cap * 0.65)
    tm = min(m_cap, 128)
    # Weights are re-streamed from HBM once per row tile, so prefer the biggest tm that
    # fits VMEM (tm sets arithmetic intensity; tm>=512 moves v6e/v7x past the HBM roofline).
    for cand in (512, 256, 128):
        if cand <= m_cap and _vmem_estimate(cand, ti, D, w_itemsize, out_itemsize) <= budget:
            tm = cand
            break
    # v7x (64 MiB VMEM/TC, 2 TensorCores): make sure the "parallel" row axis has >= 2 blocks
    # for medium M so the second core isn't idle.
    if known and cap <= 64 * _MIB and M >= 256 and _cdiv(M, tm) == 1:
        tm = max(128, _round_up(_cdiv(M, 2), 128))
    return tm


def _act_gate_down(gu, wd_ref, *, ti, n_sub, activation):
    """gate/up split, activation gate, down-proj partial sum (f32).

    Split into n_sub static sub-chunks so the down-proj MXU matmul of chunk j can run while
    the activation VPU/EUP math of chunk j+1 is computed (independent work, different slots).
    """
    tis = ti // n_sub
    partial = None
    for j in range(n_sub):
        lo, hi = j * tis, (j + 1) * tis
        gate = gu[:, lo:hi]
        up = gu[:, ti + lo:ti + hi]
        act = _gelu_exact(gate) if activation == "gelu" else jnp.maximum(gate, 0.0)
        z = (up * act).astype(wd_ref.dtype)
        p = jnp.dot(z, wd_ref[lo:hi, :], preferred_element_type=jnp.float32)
        partial = p if partial is None else partial + p
    return partial


def mlp_kernel_acc(x_ref, wgu_ref, wd_ref, o_ref, acc_ref, *, ti, n_sub, activation):
    k = pl.program_id(1)
    # Fused gate+up projection: one MXU pass, f32 accumulation (inputs stay native dtype).
    gu = jnp.dot(x_ref[...], wgu_ref[...], preferred_element_type=jnp.float32)  # (tm, 2*ti)
    partial = _act_gate_down(gu, wd_ref, ti=ti, n_sub=n_sub, activation=activation)

    @pl.when(k == 0)
    def _():
        acc_ref[...] = partial          # no separate zero-init pass

    @pl.when(k > 0)
    def _():
        acc_ref[...] += partial

    @pl.when(k == pl.num_programs(1) - 1)
    def _():
        o_ref[...] = acc_ref[...].astype(o_ref.dtype)


def mlp_kernel_single(x_ref, wgu_ref, wd_ref, o_ref, *, ti, n_sub, activation):
    # Specialization for n_ti == 1: no accumulator scratch, write the output block directly.
    gu = jnp.dot(x_ref[...], wgu_ref[...], preferred_element_type=jnp.float32)
    partial = _act_gate_down(gu, wd_ref, ti=ti, n_sub=n_sub, activation=activation)
    o_ref[...] = partial.astype(o_ref.dtype)


def prepare_mlp_weights(w_gate_up, w_down, *, inter_tile=None, compute_dtype=None):
    """One-time weight prep (do NOT repeat per forward call).

    w_gate_up: (2*I, D) PyTorch nn.Linear layout (gate rows first, then up rows)
    w_down:    (D, I)   PyTorch nn.Linear layout
    compute_dtype: pass jnp.bfloat16 for production (f32 MXU inputs waste throughput + HBM BW).

    Returns:
      wgu: (n_ti, D, 2*ti)  block k holds [gate cols k*ti:(k+1)*ti | up cols k*ti:(k+1)*ti]
      wd:  (n_ti, ti, D)
    """
    two_i, D = w_gate_up.shape
    I = two_i // 2
    dt = jnp.dtype(compute_dtype) if compute_dtype is not None else jnp.dtype(w_gate_up.dtype)
    ti = _pick_inter_tile(I, D, dt.itemsize, inter_tile)
    n_ti = I // ti

    wg = w_gate_up[:I].T.astype(dt)                       # (D, I)
    wu = w_gate_up[I:].T.astype(dt)                       # (D, I)
    wg_b = wg.reshape(D, n_ti, ti).transpose(1, 0, 2)     # (n_ti, D, ti)
    wu_b = wu.reshape(D, n_ti, ti).transpose(1, 0, 2)     # (n_ti, D, ti)
    wgu = jnp.concatenate([wg_b, wu_b], axis=-1)          # (n_ti, D, 2*ti)
    wd = w_down.T.astype(dt).reshape(n_ti, ti, D)         # (n_ti, ti, D)
    return wgu, wd


def mlp_forward(hidden_states, wgu, wd, *, row_tile=None, activation="gelu"):
    """hidden_states: (B, S, D); wgu/wd from prepare_mlp_weights."""
    if activation not in ("gelu", "relu"):
        raise ValueError("Unsupported activation function, currently supported: `gelu, relu`")

    B, S, D = hidden_states.shape
    n_ti, _, two_ti = wgu.shape
    ti = two_ti // 2
    I = n_ti * ti
    M = B * S

    w_dtype = jnp.dtype(wgu.dtype)
    out_dtype = jnp.dtype(hidden_states.dtype)
    w_itemsize, out_itemsize = w_dtype.itemsize, out_dtype.itemsize

    tm = _pick_row_tile(M, ti, D, w_itemsize, out_itemsize, row_tile)
    n_row = _cdiv(M, tm)  # boundary block handled by Pallas masked stores -> no host-side pad
    n_sub = 2 if ti % 256 == 0 else 1

    x2d = hidden_states.reshape(M, D).astype(w_dtype)

    cost = pl.CostEstimate(
        flops=6 * M * D * I,                               # 2*M*D*2I (gate/up) + 2*M*I*D (down)
        transcendentals=M * I if activation == "gelu" else 0,
        bytes_accessed=(M * D * w_itemsize                 # x read once per row tile (resident over k)
                        + n_row * 3 * D * I * w_itemsize   # weights re-streamed per row tile
                        + M * D * out_itemsize),
    )

    vmem_est = _vmem_estimate(tm, ti, D, w_itemsize, out_itemsize)
    cap, _ = _tpu_vmem_capacity()
    # Always set the scoped limit explicitly (v5e's 16 MiB default is easy to exceed),
    # but never above ~0.85x physical VMEM (v7x only has 64 MiB per TensorCore).
    vmem_limit = int(min(max(vmem_est * 3 // 2, 32 * _MIB), cap * 0.85))

    if n_ti == 1:
        kernel = functools.partial(mlp_kernel_single, ti=ti, n_sub=n_sub, activation=activation)
        scratch = []
    else:
        kernel = functools.partial(mlp_kernel_acc, ti=ti, n_sub=n_sub, activation=activation)
        scratch = [pltpu.VMEM((tm, D), jnp.float32)]

    out2d = pl.pallas_call(
        kernel,
        out_shape=jax.ShapeDtypeStruct((M, D), out_dtype),
        grid_spec=pltpu.PrefetchScalarGridSpec(
            num_scalar_prefetch=0,
            grid=(n_row, n_ti),                            # rows parallel (outer), I reduction (inner)
            in_specs=[
                pl.BlockSpec((tm, D), lambda i, k: (i, 0)),
                pl.BlockSpec((None, D, 2 * ti), lambda i, k: (k, 0, 0)),
                pl.BlockSpec((None, ti, D), lambda i, k: (k, 0, 0)),
            ],
            out_specs=pl.BlockSpec((tm, D), lambda i, k: (i, 0)),
            scratch_shapes=scratch,
        ),
        compiler_params=pltpu.CompilerParams(
            dimension_semantics=("parallel", "arbitrary"),
            vmem_limit_bytes=vmem_limit,
        ),
        cost_estimate=cost,
    )(x2d, wgu, wd)

    return out2d.reshape(B, S, D)


def mlp_reference(hidden_states, w_gate_up, w_down, activation="gelu"):
    # Pure-JAX reference matching the PyTorch forward exactly.
    up_states = jnp.einsum("bsd,od->bso", hidden_states, w_gate_up)
    gate, up = jnp.split(up_states, 2, axis=-1)
    g = _gelu_exact(gate) if activation == "gelu" else jnp.maximum(gate, 0.0)
    return jnp.einsum("bsi,di->bsd", up * g, w_down)


if __name__ == "__main__":
    key = jax.random.PRNGKey(0)
    keys = jax.random.split(key, 9)

    # ---- Test 1: module-consistent small shapes (D=32, I=64, B=2, S=8), f32, gelu ----
    D, I, B, S = 32, 64, 2, 8
    w_gu = jax.random.uniform(keys[0], (2 * I, D), jnp.float32,
                              minval=-1.0 / math.sqrt(D), maxval=1.0 / math.sqrt(D))
    w_dn = jax.random.uniform(keys[1], (D, I), jnp.float32,
                              minval=-1.0 / math.sqrt(I), maxval=1.0 / math.sqrt(I))
    x = jax.random.normal(keys[2], (B, S, D), jnp.float32)
    wgu, wd = prepare_mlp_weights(w_gu, w_dn)
    out = jax.block_until_ready(mlp_forward(x, wgu, wd, activation="gelu"))
    ref = mlp_reference(x, w_gu, w_dn, "gelu")
    assert out.shape == (B, S, D)
    assert jnp.allclose(out, ref, atol=1e-5, rtol=1e-5), "mismatch vs reference (test 1)"

    # ---- Test 2: I-tiling (accumulator path) + ragged rows (M=30, tm=16 -> masked boundary), relu ----
    D2, I2, B2, S2 = 32, 128, 3, 10
    w_gu2 = jax.random.uniform(keys[3], (2 * I2, D2), jnp.float32,
                               minval=-1.0 / math.sqrt(D2), maxval=1.0 / math.sqrt(D2))
    w_dn2 = jax.random.uniform(keys[4], (D2, I2), jnp.float32,
                               minval=-1.0 / math.sqrt(I2), maxval=1.0 / math.sqrt(I2))
    x2 = jax.random.normal(keys[5], (B2, S2, D2), jnp.float32)
    wgu2, wd2 = prepare_mlp_weights(w_gu2, w_dn2, inter_tile=64)
    out2 = jax.block_until_ready(mlp_forward(x2, wgu2, wd2, row_tile=16, activation="relu"))
    ref2 = mlp_reference(x2, w_gu2, w_dn2, "relu")
    assert out2.shape == (B2, S2, D2)
    assert jnp.allclose(out2, ref2, atol=1e-5, rtol=1e-5), "mismatch vs reference (test 2)"

    # ---- Test 3: production-style bf16 compute path + sub-chunk overlap (ti=256 -> n_sub=2) ----
    D3, I3, B3, S3 = 128, 256, 2, 24
    w_gu3 = jax.random.uniform(keys[6], (2 * I3, D3), jnp.float32,
                               minval=-1.0 / math.sqrt(D3), maxval=1.0 / math.sqrt(D3))
    w_dn3 = jax.random.uniform(keys[7], (D3, I3), jnp.float32,
                               minval=-1.0 / math.sqrt(I3), maxval=1.0 / math.sqrt(I3))
    x3 = jax.random.normal(keys[8], (B3, S3, D3), jnp.float32)
    wgu3, wd3 = prepare_mlp_weights(w_gu3, w_dn3, compute_dtype=jnp.bfloat16)
    out3 = jax.block_until_ready(mlp_forward(x3, wgu3, wd3, activation="gelu"))
    ref3 = mlp_reference(x3, w_gu3, w_dn3, "gelu")
    max_err = float(jnp.max(jnp.abs(out3 - ref3)))
    assert out3.shape == (B3, S3, D3)
    assert max_err < 5e-2, f"bf16 path error too large: {max_err}"  # looser tol: bf16 MXU inputs

    print("KERNEL_OK")
</pallas_src>

<mosaic_0001>
module attributes {stable_mosaic.version = 11 : i64} {
  func.func @mlp_kernel_single(%arg0: i32, %arg1: i32, %arg2: memref<16x32xf32, #tpu.memory_space<vmem>>, %arg3: memref<1x32x128xf32, #tpu.memory_space<vmem>>, %arg4: memref<1x64x32xf32, #tpu.memory_space<vmem>>, %arg5: memref<16x32xf32, #tpu.memory_space<vmem>>) attributes {dimension_semantics = [#tpu.dimension_semantics<parallel>, #tpu.dimension_semantics<arbitrary>], iteration_bounds = array<i64: 1, 1>, scalar_prefetch = 0 : i64, scratch_operands = 0 : i64, tpu.core_type = #tpu.core_type<tc>, window_params = [{transform_indices = @transform_0, window_bounds = array<i64: 16, 32>}, {transform_indices = @transform_1, window_bounds = array<i64: 1, 32, 128>}, {transform_indices = @transform_2, window_bounds = array<i64: 1, 64, 32>}, {transform_indices = @transform_3, window_bounds = array<i64: 16, 32>}]} {
    %c0 = arith.constant 0 : index
    %c0_0 = arith.constant 0 : index
    %0 = vector.load %arg2[%c0, %c0_0] : memref<16x32xf32, #tpu.memory_space<vmem>>, vector<16x32xf32>
    %c0_1 = arith.constant 0 : index
    %c0_2 = arith.constant 0 : index
    %c0_3 = arith.constant 0 : index
    %1 = vector.load %arg3[%c0_1, %c0_2, %c0_3] : memref<1x32x128xf32, #tpu.memory_space<vmem>>, vector<1x32x128xf32>
    %2 = vector.shape_cast %1 : vector<1x32x128xf32> to vector<32x128xf32>
    %cst = arith.constant dense<0.000000e+00> : vector<16x128xf32>
    %3 = tpu.matmul %0, %2, %cst {dimension_numbers = #tpu.dot_dimension_numbers<[1], [0], [0], [1], [0, 0, 1, 1], [], []>} : vector<16x32xf32>, vector<32x128xf32>, vector<16x128xf32> -> vector<16x128xf32>
    %4 = vector.extract_strided_slice %3 {offsets = [0, 0], sizes = [16, 64], strides = [1, 1]} : vector<16x128xf32> to vector<16x64xf32>
    %5 = vector.extract_strided_slice %3 {offsets = [0, 64], sizes = [16, 64], strides = [1, 1]} : vector<16x128xf32> to vector<16x64xf32>
    %cst_4 = arith.constant 5.000000e-01 : f32
    %6 = vector.broadcast %cst_4 : f32 to vector<16x64xf32>
    %7 = arith.mulf %6, %4 : vector<16x64xf32>
    %cst_5 = arith.constant 0.707106769 : f32
    %8 = vector.broadcast %cst_5 : f32 to vector<16x64xf32>
    %9 = arith.mulf %4, %8 : vector<16x64xf32>
    %10 = math.erf %9 : vector<16x64xf32>
    %cst_6 = arith.constant 1.000000e+00 : f32
    %11 = vector.broadcast %cst_6 : f32 to vector<16x64xf32>
    %12 = arith.addf %11, %10 : vector<16x64xf32>
    %13 = arith.mulf %7, %12 : vector<16x64xf32>
    %14 = arith.mulf %5, %13 : vector<16x64xf32>
    %c0_7 = arith.constant 0 : index
    %c0_8 = arith.constant 0 : index
    %c0_9 = arith.constant 0 : index
    %15 = vector.load %arg4[%c0_7, %c0_8, %c0_9] : memref<1x64x32xf32, #tpu.memory_space<vmem>>, vector<1x64x32xf32>
    %16 = vector.shape_cast %15 : vector<1x64x32xf32> to vector<64x32xf32>
    %cst_10 = arith.constant dense<0.000000e+00> : vector<16x32xf32>
    %17 = tpu.matmul %14, %16, %cst_10 {dimension_numbers = #tpu.dot_dimension_numbers<[1], [0], [0], [1], [0, 0, 1, 1], [], []>} : vector<16x64xf32>, vector<64x32xf32>, vector<16x32xf32> -> vector<16x32xf32>
    %c0_11 = arith.constant 0 : index
    %c0_12 = arith.constant 0 : index
    %18 = vector.load %arg5[%c0_11, %c0_12] : memref<16x32xf32, #tpu.memory_space<vmem>>, vector<16x32xf32>
    tpu.vector_store %arg5[%c0_11, %c0_12], %17 {strides = array<i32>} : memref<16x32xf32, #tpu.memory_space<vmem>>, vector<16x32xf32>,
    return
  }
  func.func @transform_0(%arg0: i32, %arg1: i32) -> (i32, i32) {
    %c0_i32 = arith.constant 0 : i32
    %c0_i32_0 = arith.constant 0 : i32
    return %arg0, %c0_i32 : i32, i32
  }
  func.func @transform_1(%arg0: i32, %arg1: i32) -> (i32, i32, i32) {
    %c0_i32 = arith.constant 0 : i32
    %c0_i32_0 = arith.constant 0 : i32
    %c0_i32_1 = arith.constant 0 : i32
    return %arg1, %c0_i32, %c0_i32_0 : i32, i32, i32
  }
  func.func @transform_2(%arg0: i32, %arg1: i32) -> (i32, i32, i32) {
    %c0_i32 = arith.constant 0 : i32
    %c0_i32_0 = arith.constant 0 : i32
    %c0_i32_1 = arith.constant 0 : i32
    return %arg1, %c0_i32, %c0_i32_0 : i32, i32, i32
  }
  func.func @transform_3(%arg0: i32, %arg1: i32) -> (i32, i32) {
    %c0_i32 = arith.constant 0 : i32
    %c0_i32_0 = arith.constant 0 : i32
    return %arg0, %c0_i32 : i32, i32
  }
}

</mosaic_0001>

<llo_original>
// kernel: tpu_custom_call.1
$region0: #{tpu_custom_call.1}
  #allocation0 [shape = 'u32[]', space=smem, size = 0x4, offset = 0x4, fixed_abs, tag = 'smem constant byte address 0x4 - core index']
  #allocation1 [shape = 'u32[144,128]{1,0:T(1,128)}', space=vmem, size = 0x12000, scoped, tag = 'internal scratch']
  %s0 = inlined_call_operand.vmem [shape: f32[16,32], index: 0, kind: input, shape index: {}]
  %s1 = inlined_call_operand.vmem [shape: f32[1,32,128], index: 1, kind: input, shape index: {}]
  %s2 = inlined_call_operand.vmem [shape: f32[1,64,32], index: 2, kind: input, shape index: {}]
  %s3 = inlined_call_operand.hbm [shape: f32[16,32], index: 3, kind: output, shape index: {}]
  %s4 = sld [smem:[#allocation0]]
  $region22: #{tpu_custom_call.1} parent=0
    _
  %s6 = ssub.s32 1, %s4
  %s7 = scalar_select 0, %s6, %s4
  $region1: #{tpu_custom_call.1} parent=0
    #allocation2 [shape = 'u8[8192]{0}', space=vmem, size = 0x2000, scoped, tag = 'output window, operand 0, single buffered']
    #allocation3 [shape = 's32[1]{0}', space=sflag, size = 0x4, scoped, tag = 'scoped memory for tpu_custom_call.1']
    %8 = vsyncpa [#allocation3], 0
    // Predicated region
    $region2: #{tpu_custom_call.1} parent=1 // pred_check
      _
    $region3: #{tpu_custom_call.1} parent=1 // pred_check_branch
      %10 = sbr.rel (0) target = $region5
    $region4: #{tpu_custom_call.1} parent=1 // pred_region
      _
    $region5: #{tpu_custom_call.1} parent=1 // pred_fallthru
      _
    // Predicated region
    $region6: #{tpu_custom_call.1} parent=1 // pred_check
      _
    $region7: #{tpu_custom_call.1} parent=1 // pred_check_branch
      %12 = sbr.rel (0) target = $region9
    $region8: #{tpu_custom_call.1} parent=1 // pred_region
      _
    $region9: #{tpu_custom_call.1} parent=1 // pred_fallthru
      _
    // Predicated region
    $region10: #{tpu_custom_call.1} parent=1 // pred_check
      _
    $region11: #{tpu_custom_call.1} parent=1 // pred_check_branch
      %14 = sbr.rel (0) target = $region13
    $region12: #{tpu_custom_call.1} parent=1 // pred_region
      _
    $region13: #{tpu_custom_call.1} parent=1 // pred_fallthru
      _
    %v15 = vld [vmem:[%s0] sm:$0xff]
    %v16 = vld [vmem:[%s0 + $0x8] sm:$0xff]
    %v17 = vld [vmem:[%s1] sm:$0xff]
    %v18 = vld [vmem:[%s1 + $0x8] sm:$0xff]
    %v19 = vld [vmem:[%s1 + $0x10] sm:$0xff]
    %v20 = vld [vmem:[%s1 + $0x18] sm:$0xff]
    %vm21 = vcmask 261120
    %v23 = vsel %vm21, %v15, 0
    %v26 = vsel %vm21, %v16, 0
    %28 = vmatprep.subr.mxu0 0.0
    %29 = vmatpush1.msra.mxu0 %v17
    %30 = vmatprep.subr.mxu0 0.0
    %31 = vmatpush1.msra.mxu0 %v18
    %32 = vmatprep.subr.mxu0 0.0
    %33 = vmatpush1.msra.mxu0 %v19
    %34 = vmatprep.subr.mxu0 0.0
    %35 = vmatpush1.msra.mxu0 %v20
    %36 = vmatprep.subr.mxu0 0.0
    %37 = vmatpush1.msra.mxu0 0.0
    %38 = vmatprep.subr.mxu0 0.0
    %39 = vmatpush1.msra.mxu0 0.0
    %40 = vmatprep.subr.mxu0 0.0
    %41 = vmatpush1.msra.mxu0 0.0
    %42 = vmatprep.subr.mxu0 0.0
    %43 = vmatpush1.msra.mxu0 0.0
    %44 = vmatprep.subr.mxu0 0.0
    %45 = vmatpush1.msra.mxu0 0.0
    %46 = vmatprep.subr.mxu0 0.0
    %47 = vmatpush1.msra.mxu0 0.0
    %48 = vmatprep.subr.mxu0 0.0
    %49 = vmatpush1.msra.mxu0 0.0
    %50 = vmatprep.subr.mxu0 0.0
    %51 = vmatpush1.msra.mxu0 0.0
    %52 = vmatprep.subr.mxu0 0.0
    %53 = vmatpush1.msra.mxu0 0.0
    %54 = vmatprep.subr.mxu0 0.0
    %55 = vmatpush1.msra.mxu0 0.0
    %56 = vmatprep.subr.mxu0 0.0
    %57 = vmatpush1.msra.mxu0 0.0
    %58 = vmatprep.subr.mxu0 0.0
    %59 = vmatpush1.msra.mxu0 0.0
    %60 = vmatprep.subr.mxu0 0.0
    %61 = vmatpush1.msra.mxu0 0.0
    %62 = vmatprep.subr.mxu0 0.0
    %63 = vmatpush1.msra.mxu0 0.0
    %64 = vmatprep.subr.mxu0 0.0
    %65 = vmatpush1.msra.mxu0 0.0
    %66 = vmatprep.subr.mxu0 0.0
    %67 = vmatpush1.msra.mxu0 0.0
    %68 = vmatprep.subr.mxu0 0.0
    %69 = vmatpush1.msra.mxu0 0.0
    %70 = vmatprep.subr.mxu0 0.0
    %71 = vmatpush1.msra.mxu0 0.0
    %72 = vmatprep.subr.mxu0 0.0
    %73 = vmatpush1.msra.mxu0 0.0
    %74 = vmatprep.subr.mxu0 0.0
    %75 = vmatpush1.msra.mxu0 0.0
    %76 = vmatprep.subr.mxu0 0.0
    %77 = vmatpush1.msra.mxu0 0.0
    %78 = vmatprep.subr.mxu0 0.0
    %79 = vmatpush1.msra.mxu0 0.0
    %80 = vmatprep.subr.mxu0 0.0
    %81 = vmatpush1.msra.mxu0 0.0
    %82 = vmatprep.subr.mxu0 0.0
    %83 = vmatpush1.msra.mxu0 0.0
    %84 = vmatprep.subr.mxu0 0.0
    %85 = vmatpush1.msra.mxu0 0.0
    %86 = vmatprep.subr.mxu0 0.0
    %87 = vmatpush1.msra.mxu0 0.0
    %88 = vmatprep.subr.mxu0 0.0
    %89 = vmatpush1.msra.mxu0 0.0
    %90 = vmatprep.subr.mxu0 0.0
    %91 = vmatpush1.msra.mxu0 0.0
    %92 = vmatprep.mubr.f32.mxu0 0.0
    %93 = vmatmul.mubr.f32.gmra.mrb[0].mxu0 %v23
    %v94 = vpop.f32.mrb[0].mxu0
    %v95 = vadd.f32 0.0, %v94
    %v96 = vpop.f32.mrb[0].mxu0
    %97 = vmatprep.mubr.f32.mxu0 0.0
    %98 = vmatmul.mubr.f32.gmra.mrb[0].mxu0 %v26
    %v99 = vpop.f32.mrb[0].mxu0
    %v100 = vadd.f32 0.0, %v99
    %v101 = vpop.f32.mrb[0].mxu0
    %102 = vdwg.mxu0
    %v103 = vmul.f32 %v95, 0.5
    %v104 = vmul.f32 %v100, 0.5
    %v105 = vmul.f32 %v95, 0.70710677
    %v106 = vmul.f32 %v100, 0.70710677
    %v107 = verf.f32.pop %v105
    %v108 = verf.f32.pop %v106
    %v109 = vadd.f32 %v107, 1.0
    %v110 = vadd.f32 %v108, 1.0
    %v111 = vmul.f32 %v103, %v109
    %v112 = vmul.f32 %v104, %v110
    %115 = vrot.lane.b32.xlu0 %v111, 64
    %v116 = vpop.permute.xlu0 %115
    %117 = vrot.lane.b32.xlu0 %v112, 64
    %v118 = vpop.permute.xlu0 %117
    %v121 = vmul.f32 %v95, %v116
    %v122 = vmul.f32 %v100, %v118
    %v123 = vld [vmem:[%s2] sm:$0xff]
    %v124 = vld [vmem:[%s2 + $0x8] sm:$0xff]
    %v125 = vld [vmem:[%s2 + $0x10] sm:$0xff]
    %v126 = vld [vmem:[%s2 + $0x18] sm:$0xff]
    %v127 = vld [vmem:[%s2 + $0x20] sm:$0xff]
    %v128 = vld [vmem:[%s2 + $0x28] sm:$0xff]
    %v129 = vld [vmem:[%s2 + $0x30] sm:$0xff]
    %v130 = vld [vmem:[%s2 + $0x38] sm:$0xff]
    %133 = vrot.lane.b32.xlu0 %v121, 64
    %v134 = vpop.permute.xlu0 %133
    %135 = vrot.lane.b32.xlu0 %v122, 64
    %v136 = vpop.permute.xlu0 %135
    %vm137 = vcmask 523264
    %v138 = vsel %vm137, %v134, 0
    %v140 = vsel %vm137, %v136, 0
    %142 = vmatprep.subr.mxu0 0.0
    %143 = vmatpush1.msra.mxu0 %v123
    %144 = vmatprep.subr.mxu0 0.0
    %145 = vmatpush1.msra.mxu0 %v124
    %146 = vmatprep.subr.mxu0 0.0
    %147 = vmatpush1.msra.mxu0 %v125
    %148 = vmatprep.subr.mxu0 0.0
    %149 = vmatpush1.msra.mxu0 %v126
    %150 = vmatprep.subr.mxu0 0.0
    %151 = vmatpush1.msra.mxu0 %v127
    %152 = vmatprep.subr.mxu0 0.0
    %153 = vmatpush1.msra.mxu0 %v128
    %154 = vmatprep.subr.mxu0 0.0
    %155 = vmatpush1.msra.mxu0 %v129
    %156 = vmatprep.subr.mxu0 0.0
    %157 = vmatpush1.msra.mxu0 %v130
    %158 = vmatprep.subr.mxu0 0.0
    %159 = vmatpush1.msra.mxu0 0.0
    %160 = vmatprep.subr.mxu0 0.0
    %161 = vmatpush1.msra.mxu0 0.0
    %162 = vmatprep.subr.mxu0 0.0
    %163 = vmatpush1.msra.mxu0 0.0
    %164 = vmatprep.subr.mxu0 0.0
    %165 = vmatpush1.msra.mxu0 0.0
    %166 = vmatprep.subr.mxu0 0.0
    %167 = vmatpush1.msra.mxu0 0.0
    %168 = vmatprep.subr.mxu0 0.0
    %169 = vmatpush1.msra.mxu0 0.0
    %170 = vmatprep.subr.mxu0 0.0
    %171 = vmatpush1.msra.mxu0 0.0
    %172 = vmatprep.subr.mxu0 0.0
    %173 = vmatpush1.msra.mxu0 0.0
    %174 = vmatprep.subr.mxu0 0.0
    %175 = vmatpush1.msra.mxu0 0.0
    %176 = vmatprep.subr.mxu0 0.0
    %177 = vmatpush1.msra.mxu0 0.0
    %178 = vmatprep.subr.mxu0 0.0
    %179 = vmatpush1.msra.mxu0 0.0
    %180 = vmatprep.subr.mxu0 0.0
    %181 = vmatpush1.msra.mxu0 0.0
    %182 = vmatprep.subr.mxu0 0.0
    %183 = vmatpush1.msra.mxu0 0.0
    %184 = vmatprep.subr.mxu0 0.0
    %185 = vmatpush1.msra.mxu0 0.0
    %186 = vmatprep.subr.mxu0 0.0
    %187 = vmatpush1.msra.mxu0 0.0
    %188 = vmatprep.subr.mxu0 0.0
    %189 = vmatpush1.msra.mxu0 0.0
    %190 = vmatprep.subr.mxu0 0.0
    %191 = vmatpush1.msra.mxu0 0.0
    %192 = vmatprep.subr.mxu0 0.0
    %193 = vmatpush1.msra.mxu0 0.0
    %194 = vmatprep.subr.mxu0 0.0
    %195 = vmatpush1.msra.mxu0 0.0
    %196 = vmatprep.subr.mxu0 0.0
    %197 = vmatpush1.msra.mxu0 0.0
    %198 = vmatprep.subr.mxu0 0.0
    %199 = vmatpush1.msra.mxu0 0.0
    %200 = vmatprep.subr.mxu0 0.0
    %201 = vmatpush1.msra.mxu0 0.0
    %202 = vmatprep.subr.mxu0 0.0
    %203 = vmatpush1.msra.mxu0 0.0
    %204 = vmatprep.subr.mxu0 0.0
    %205 = vmatpush1.msra.mxu0 0.0
    %206 = vmatprep.mubr.f32.mxu0 0.0
    %207 = vmatmul.mubr.f32.gmra.mrb[0].mxu0 %v138
    %v208 = vpop.f32.mrb[0].mxu0
    %v209 = vadd.f32 0.0, %v208
    %v210 = vpop.f32.mrb[0].mxu0
    %211 = vmatprep.mubr.f32.mxu0 0.0
    %212 = vmatmul.mubr.f32.gmra.mrb[0].mxu0 %v140
    %v213 = vpop.f32.mrb[0].mxu0
    %v214 = vadd.f32 0.0, %v213
    %v215 = vpop.f32.mrb[0].mxu0
    %216 = vdwg.mxu0
    %217 = vst.msk [vmem:[#allocation2] sm:$0xff] %vm21, %v209
    %218 = vst.msk [vmem:[#allocation2 + $0x8] sm:$0xff] %vm21, %v214
    // Predicated region
    $region14: #{tpu_custom_call.1} parent=1 // pred_check
      _
    $region15: #{tpu_custom_call.1} parent=1 // pred_check_branch
      %220 = sbr.rel (0) target = $region17
    $region16: #{tpu_custom_call.1} parent=1 // pred_region
      %s222 = ssub.s32 256, 256
      %223 = vsyncadd [#allocation3], %s222
      %s224 = sshll.u32 [#allocation2], 4
      %s225 = int_to_ptr.vmem [resolvable:$true] %s224
      %230 = dma.vmem_to_hbm [thread:$0]  %s225, 256, %s3, [#allocation3], 128, 128, 8
    $region17: #{tpu_custom_call.1} parent=1 // pred_fallthru
      _
    // Predicated region
    $region18: #{tpu_custom_call.1} parent=1 // pred_check
      _
    $region19: #{tpu_custom_call.1} parent=1 // pred_check_branch
      %232 = sbr.rel (0) target = $region21
    $region20: #{tpu_custom_call.1} parent=1 // pred_region
      %233 = dma.done [#allocation3], 256
    $region21: #{tpu_custom_call.1} parent=1 // pred_fallthru
      _
    %234 = vsyncpa [#allocation3], 1

</llo_original>
